<compile_context>
chip_gen: v5e
topology: v5e:2x2
jax: 0.10.0
libtpu: 0.0.40
codegen_flags: <defaults>
</compile_context>

<pallas_src>
import functools

import jax
import jax.numpy as jnp
from jax import lax
from jax.experimental import pallas as pl
from jax.experimental.pallas import tpu as pltpu


def _round_up(x, m):
    return ((x + m - 1) // m) * m


def _pick_time_tile(T, P, target=2048):
    """Time tile TT that divides T, is a multiple of 128 and >= P.

    TT % 128 == 0 is the lane constraint on the BlockSpec; TT >= P guarantees
    the cross-tile causal-context carry comes entirely from the previous tile.
    Prefer the largest valid divisor <= target; if P > target take the
    smallest valid divisor >= P; otherwise fall back to the full sequence.
    """
    if T <= target:
        return T
    divs = [d for d in range(128, T, 128) if T % d == 0 and d >= P]
    below = [d for d in divs if d <= target]
    if below:
        return max(below)
    if divs:
        return min(divs)
    return T


# ---------------------------------------------------------------------------
# Fused TemporalBlock kernel
# ---------------------------------------------------------------------------
def _temporal_block_kernel(x_ref, w1_ref, b1_ref, w2_ref, b2_ref, wds_ref,
                           bds_ref, o_ref, xpad_ref, hpad_ref, *,
                           K, dil, P, TT, Cin, has_downsample):
    # x_ref   : (1, Cin, TT)          current input time tile (NCW slice)
    # w1_ref  : (Cout_p, K*Cin_p)     conv1, K taps fused along contraction
    # w2_ref  : (Cout_p, K*Cout_p)    conv2, K taps fused along contraction
    # wds_ref : (Cout_p, Cin_p)       1x1 downsample (unused if identity res)
    # b*_ref  : (Cout_p, 1)           fp32 biases (broadcast over time/lanes)
    # o_ref   : (1, Cout_p, TT)       sublane-padded output tile
    # xpad_ref: (Cin_p,  P + TT)      VMEM: causal-padded x window (input dtype)
    # hpad_ref: (Cout_p, P + TT)      VMEM: causal-padded intermediate h
    ti = pl.program_id(1)

    # First time tile of every batch element: zero the scratch pads.  The
    # first P lane-columns are the causal left padding; zero-padded channel
    # rows stay zero for the whole sequence (carry copies preserve them).
    @pl.when(ti == 0)
    def _():
        xpad_ref[...] = jnp.zeros_like(xpad_ref)
        hpad_ref[...] = jnp.zeros_like(hpad_ref)

    # Stage the current x tile (channels on sublanes, time on lanes).
    xpad_ref[:Cin, P:P + TT] = x_ref[0]

    # ---- conv1: K dilated taps fused into ONE MXU matmul -------------------
    #   (Cout_p, K*Cin_p) @ (K*Cin_p, TT), fp32 accumulation.
    # TODO(synk): if XLU/vld becomes the binding slot (wide channels on v5e),
    # pre-shift the K windows once during staging instead of at every read.
    x_stack = jnp.concatenate(
        [xpad_ref[:, k * dil:k * dil + TT] for k in range(K)], axis=0)
    acc1 = jnp.dot(w1_ref[...], x_stack, preferred_element_type=jnp.float32)
    h = jnp.maximum(acc1 + b1_ref[...], 0.0)          # relu1 (dropout1 = id)
    hpad_ref[:, P:P + TT] = h.astype(hpad_ref.dtype)  # stays in VMEM, no HBM

    # ---- conv2: fused taps + bias + ReLU ------------------------------------
    h_stack = jnp.concatenate(
        [hpad_ref[:, k * dil:k * dil + TT] for k in range(K)], axis=0)
    acc2 = jnp.dot(w2_ref[...], h_stack, preferred_element_type=jnp.float32)
    out2 = jnp.maximum(acc2 + b2_ref[...], 0.0)       # relu2 (dropout2 = id)

    # ---- residual branch ----------------------------------------------------
    x_cur = xpad_ref[:, P:P + TT]
    if has_downsample:
        res = jnp.dot(wds_ref[...], x_cur,
                      preferred_element_type=jnp.float32) + bds_ref[...]
    else:
        # n_inputs == n_outputs (asserted in the wrapper) -> identity residual.
        res = x_cur.astype(jnp.float32)

    o_ref[0] = jnp.maximum(out2 + res, 0.0).astype(o_ref.dtype)

    # ---- carry: last P columns become the causal context of the next tile ---
    if P > 0:
        @pl.when(ti + 1 < pl.num_programs(1))
        def _():
            xpad_ref[:, 0:P] = xpad_ref[:, TT:TT + P]
            hpad_ref[:, 0:P] = hpad_ref[:, TT:TT + P]


# ---------------------------------------------------------------------------
# Wrapper (PyTorch NCW interface, weights stored PyTorch-style)
# ---------------------------------------------------------------------------
def temporal_block_forward(x_ncw, params, *, kernel_size, dilation, padding,
                           time_tile_target=2048):
    """x_ncw: (B, C_in, L) — same layout as the PyTorch module."""
    B, Cin, T = x_ncw.shape
    K = kernel_size
    P = padding
    dtype = x_ncw.dtype

    Cout = params["w1"].shape[0]
    has_downsample = params.get("w_ds", None) is not None
    if not has_downsample:
        assert Cin == Cout, "identity residual requires n_inputs == n_outputs"

    # Pad channel dims to sublane multiples ONCE, on the weights only.
    Cin_p = _round_up(Cin, 8)
    Cout_p = _round_up(Cout, 8)

    def pad_w_fused(w, co_p, ci_p):
        # (Cout, Cin, K) -> (co_p, K*ci_p): contraction index is (k major, ci).
        co, ci, k = w.shape
        w = jnp.pad(w, ((0, co_p - co), (0, ci_p - ci), (0, 0)))
        return jnp.transpose(w, (0, 2, 1)).reshape(co_p, k * ci_p).astype(dtype)

    def pad_b(b, c):       # (Cout,) -> (c, 1) fp32, zero-padded
        return jnp.pad(b.astype(jnp.float32), (0, c - b.shape[0]))[:, None]

    w1f = pad_w_fused(params["w1"], Cout_p, Cin_p)
    w2f = pad_w_fused(params["w2"], Cout_p, Cout_p)
    b1p = pad_b(params["b1"], Cout_p)
    b2p = pad_b(params["b2"], Cout_p)
    if has_downsample:
        wdsp = jnp.pad(params["w_ds"][:, :, 0],
                       ((0, Cout_p - Cout), (0, Cin_p - Cin))).astype(dtype)
        bdsp = pad_b(params["b_ds"], Cout_p)
    else:
        wdsp = jnp.zeros((Cout_p, Cin_p), dtype)          # unused
        bdsp = jnp.zeros((Cout_p, 1), jnp.float32)        # unused

    TT = _pick_time_tile(T, P, time_tile_target)
    NT = T // TT

    # VMEM budget: scratch + double-buffered x/out tiles + (double-buffered)
    # weights.  Only raise the scoped limit when needed; cap at 64 MiB so a
    # config tuned on v5e/v6e (128 MiB) cannot silently OOM v7x (64 MiB).
    itemsize = jnp.dtype(dtype).itemsize
    vmem_need = (
        (Cin_p + Cout_p) * (P + TT) * itemsize
        + 2 * (Cin + Cout_p) * TT * itemsize
        + 2 * (K * Cin_p + K * Cout_p + Cin_p) * Cout_p * itemsize
        + 4 * Cout_p * 4)
    vmem_limit = None
    if 2 * vmem_need > (30 << 20):
        vmem_limit = min(2 * vmem_need, 64 << 20)

    kernel = functools.partial(
        _temporal_block_kernel, K=K, dil=dilation, P=P, TT=TT,
        Cin=Cin, has_downsample=has_downsample)

    # TODO(synk): mark the constant weight/bias BlockSpecs single-buffered
    # (pipeline_mode=pl.Buffered(1)) once verified on-target, to reclaim VMEM
    # for a larger TT at large channel counts.
    # TODO(synk): for B==1 on v7x, replace the sequential time carry with a
    # halo-loaded (TT+P) x window so the time axis can be marked "parallel"
    # and both TensorCores light up.
    out = pl.pallas_call(
        kernel,
        out_shape=jax.ShapeDtypeStruct((B, Cout_p, T), dtype),
        grid=(B, NT),
        in_specs=[
            pl.BlockSpec((1, Cin, TT), lambda b, t: (b, 0, t)),
            pl.BlockSpec((Cout_p, K * Cin_p), lambda b, t: (0, 0)),
            pl.BlockSpec((Cout_p, 1), lambda b, t: (0, 0)),
            pl.BlockSpec((Cout_p, K * Cout_p), lambda b, t: (0, 0)),
            pl.BlockSpec((Cout_p, 1), lambda b, t: (0, 0)),
            pl.BlockSpec((Cout_p, Cin_p), lambda b, t: (0, 0)),
            pl.BlockSpec((Cout_p, 1), lambda b, t: (0, 0)),
        ],
        out_specs=pl.BlockSpec((1, Cout_p, TT), lambda b, t: (b, 0, t)),
        scratch_shapes=[
            pltpu.VMEM((Cin_p, P + TT), dtype),    # causal-padded x window
            pltpu.VMEM((Cout_p, P + TT), dtype),   # causal-padded h window
        ],
        compiler_params=pltpu.CompilerParams(
            dimension_semantics=("parallel", "arbitrary"),
            vmem_limit_bytes=vmem_limit),
    )(x_ncw, w1f, b1p, w2f, b2p, wdsp, bdsp)

    return out if Cout_p == Cout else out[:, :Cout, :]


# ---------------------------------------------------------------------------
# Pure-JAX reference (lax.conv_general_dilated) for validation
# ---------------------------------------------------------------------------
def _ref_conv1d(x_ncw, w, b, *, dilation, padding):
    out = lax.conv_general_dilated(
        x_ncw, w, window_strides=(1,), padding=[(padding, padding)],
        rhs_dilation=(dilation,), dimension_numbers=("NCH", "OIH", "NCH"))
    out = out + b[None, :, None]
    return out[:, :, : x_ncw.shape[-1]]  # Chomp1d(padding)


def temporal_block_reference(x_ncw, params, *, dilation, padding):
    h = jax.nn.relu(_ref_conv1d(x_ncw, params["w1"], params["b1"],
                                dilation=dilation, padding=padding))
    out = jax.nn.relu(_ref_conv1d(h, params["w2"], params["b2"],
                                  dilation=dilation, padding=padding))
    if params.get("w_ds", None) is not None:
        res = lax.conv_general_dilated(
            x_ncw, params["w_ds"], window_strides=(1,), padding=[(0, 0)],
            dimension_numbers=("NCH", "OIH", "NCH")) + params["b_ds"][None, :, None]
    else:
        res = x_ncw
    return jax.nn.relu(out + res)


def _make_params(key, Cin, Cout, K, with_downsample):
    ks = jax.random.split(key, 6)
    params = {
        "w1": 0.01 * jax.random.normal(ks[0], (Cout, Cin, K), jnp.float32),
        "b1": 0.01 * jax.random.normal(ks[1], (Cout,), jnp.float32),
        "w2": 0.01 * jax.random.normal(ks[2], (Cout, Cout, K), jnp.float32),
        "b2": 0.01 * jax.random.normal(ks[3], (Cout,), jnp.float32),
    }
    if with_downsample:
        params["w_ds"] = 0.01 * jax.random.normal(ks[4], (Cout, Cin, 1),
                                                  jnp.float32)
        params["b_ds"] = 0.01 * jax.random.normal(ks[5], (Cout,), jnp.float32)
    return params


def _run_case(key, B, Cin, Cout, T, K, dilation, *, time_tile_target=2048):
    padding = (K - 1) * dilation  # standard TCN causal padding
    kx, kp = jax.random.split(key)
    x = jax.random.normal(kx, (B, Cin, T), dtype=jnp.float32)
    params = _make_params(kp, Cin, Cout, K, with_downsample=(Cin != Cout))

    out = temporal_block_forward(
        x, params, kernel_size=K, dilation=dilation, padding=padding,
        time_tile_target=time_tile_target)
    out = jax.block_until_ready(out)

    ref = temporal_block_reference(x, params, dilation=dilation,
                                   padding=padding)
    assert out.shape == (B, Cout, T), out.shape
    assert jnp.allclose(out, ref, atol=1e-5, rtol=1e-5), (
        float(jnp.max(jnp.abs(out - ref))))


if __name__ == "__main__":
    root = jax.random.PRNGKey(0)
    k1, k2, k3 = jax.random.split(root, 3)

    # 1) n_inputs != n_outputs -> 1x1 downsample residual branch.
    _run_case(k1, B=2, Cin=4, Cout=8, T=16, K=3, dilation=2)

    # 2) n_inputs == n_outputs -> identity residual branch.
    _run_case(k2, B=2, Cin=8, Cout=8, T=16, K=3, dilation=1)

    # 3) Longer sequence with time tiling -> exercises the causal carry.
    _run_case(k3, B=1, Cin=4, Cout=8, T=256, K=3, dilation=2,
              time_tile_target=128)

    print("KERNEL_OK")
</pallas_src>

<mosaic_0001>
module attributes {stable_mosaic.version = 11 : i64} {
  func.func @_temporal_block_kernel(%arg0: i32, %arg1: i32, %arg2: memref<1x4x16xf32, #tpu.memory_space<vmem>>, %arg3: memref<8x24xf32, #tpu.memory_space<vmem>>, %arg4: memref<8x1xf32, #tpu.memory_space<vmem>>, %arg5: memref<8x24xf32, #tpu.memory_space<vmem>>, %arg6: memref<8x1xf32, #tpu.memory_space<vmem>>, %arg7: memref<8x8xf32, #tpu.memory_space<vmem>>, %arg8: memref<8x1xf32, #tpu.memory_space<vmem>>, %arg9: memref<1x8x16xf32, #tpu.memory_space<vmem>>, %arg10: memref<8x20xf32, #tpu.memory_space<vmem>>, %arg11: memref<8x20xf32, #tpu.memory_space<vmem>>) attributes {dimension_semantics = [#tpu.dimension_semantics<parallel>, #tpu.dimension_semantics<arbitrary>], iteration_bounds = array<i64: 2, 1>, scalar_prefetch = 0 : i64, scratch_operands = 2 : i64, tpu.core_type = #tpu.core_type<tc>, window_params = [{transform_indices = @transform_0, window_bounds = array<i64: 1, 4, 16>}, {pipeline_mode = #tpu.pipeline_mode<synchronous>, transform_indices = @transform_1, window_bounds = array<i64: 8, 24>}, {pipeline_mode = #tpu.pipeline_mode<synchronous>, transform_indices = @transform_2, window_bounds = array<i64: 8, 1>}, {pipeline_mode = #tpu.pipeline_mode<synchronous>, transform_indices = @transform_3, window_bounds = array<i64: 8, 24>}, {pipeline_mode = #tpu.pipeline_mode<synchronous>, transform_indices = @transform_4, window_bounds = array<i64: 8, 1>}, {pipeline_mode = #tpu.pipeline_mode<synchronous>, transform_indices = @transform_5, window_bounds = array<i64: 8, 8>}, {pipeline_mode = #tpu.pipeline_mode<synchronous>, transform_indices = @transform_6, window_bounds = array<i64: 8, 1>}, {transform_indices = @transform_7, window_bounds = array<i64: 1, 8, 16>}]} {
    %c0_i32 = arith.constant 0 : i32
    %0 = arith.cmpi eq, %arg1, %c0_i32 : i32
    %1 = arith.extui %0 : i1 to i32
    %c0_i32_0 = arith.constant 0 : i32
    %2 = arith.cmpi ne, %1, %c0_i32_0 : i32
    scf.if %2 {
      %cst_41 = arith.constant 0.000000e+00 : f32
      %45 = vector.broadcast %cst_41 : f32 to vector<8x20xf32>
      %c0_42 = arith.constant 0 : index
      %c0_43 = arith.constant 0 : index
      %46 = vector.load %arg10[%c0_42, %c0_43] : memref<8x20xf32, #tpu.memory_space<vmem>>, vector<8x20xf32>
      tpu.vector_store %arg10[%c0_42, %c0_43], %45 {strides = array<i32>} : memref<8x20xf32, #tpu.memory_space<vmem>>, vector<8x20xf32>,
      %cst_44 = arith.constant 0.000000e+00 : f32
      %47 = vector.broadcast %cst_44 : f32 to vector<8x20xf32>
      %c0_45 = arith.constant 0 : index
      %c0_46 = arith.constant 0 : index
      %48 = vector.load %arg11[%c0_45, %c0_46] : memref<8x20xf32, #tpu.memory_space<vmem>>, vector<8x20xf32>
      tpu.vector_store %arg11[%c0_45, %c0_46], %47 {strides = array<i32>} : memref<8x20xf32, #tpu.memory_space<vmem>>, vector<8x20xf32>,
    } else {
    }
    %c0 = arith.constant 0 : index
    %c0_1 = arith.constant 0 : index
    %c0_2 = arith.constant 0 : index
    %3 = vector.load %arg2[%c0, %c0_1, %c0_2] : memref<1x4x16xf32, #tpu.memory_space<vmem>>, vector<1x4x16xf32>
    %4 = vector.shape_cast %3 : vector<1x4x16xf32> to vector<4x16xf32>
    %c0_3 = arith.constant 0 : index
    %c4 = arith.constant 4 : index
    %5 = vector.load %arg10[%c0_3, %c4] : memref<8x20xf32, #tpu.memory_space<vmem>>, vector<4x16xf32>
    tpu.vector_store %arg10[%c0_3, %c4], %4 {strides = array<i32>} : memref<8x20xf32, #tpu.memory_space<vmem>>, vector<4x16xf32>,
    %c0_4 = arith.constant 0 : index
    %c0_5 = arith.constant 0 : index
    %6 = vector.load %arg10[%c0_4, %c0_5] : memref<8x20xf32, #tpu.memory_space<vmem>>, vector<8x16xf32>
    %c0_6 = arith.constant 0 : index
    %c2 = arith.constant 2 : index
    %7 = vector.load %arg10[%c0_6, %c2] : memref<8x20xf32, #tpu.memory_space<vmem>>, vector<8x16xf32>
    %c0_7 = arith.constant 0 : index
    %c4_8 = arith.constant 4 : index
    %8 = vector.load %arg10[%c0_7, %c4_8] : memref<8x20xf32, #tpu.memory_space<vmem>>, vector<8x16xf32>
    %9 = tpu.concatenate %6, %7, %8 in 0 : vector<8x16xf32>, vector<8x16xf32>, vector<8x16xf32> -> vector<24x16xf32>
    %c0_9 = arith.constant 0 : index
    %c0_10 = arith.constant 0 : index
    %10 = vector.load %arg3[%c0_9, %c0_10] : memref<8x24xf32, #tpu.memory_space<vmem>>, vector<8x24xf32>
    %cst = arith.constant dense<0.000000e+00> : vector<8x16xf32>
    %11 = tpu.matmul %10, %9, %cst {dimension_numbers = #tpu.dot_dimension_numbers<[1], [0], [0], [1], [0, 0, 1, 1], [], []>} : vector<8x24xf32>, vector<24x16xf32>, vector<8x16xf32> -> vector<8x16xf32>
    %c0_11 = arith.constant 0 : index
    %c0_12 = arith.constant 0 : index
    %12 = vector.load %arg4[%c0_11, %c0_12] : memref<8x1xf32, #tpu.memory_space<vmem>>, vector<8x1xf32>
    %13 = vector.broadcast %12 : vector<8x1xf32> to vector<8x16xf32>
    %14 = arith.addf %11, %13 : vector<8x16xf32>
    %cst_13 = arith.constant 0.000000e+00 : f32
    %15 = vector.broadcast %cst_13 : f32 to vector<8x16xf32>
    %16 = arith.maximumf %14, %15 : vector<8x16xf32>
    %c0_14 = arith.constant 0 : index
    %c4_15 = arith.constant 4 : index
    %17 = vector.load %arg11[%c0_14, %c4_15] : memref<8x20xf32, #tpu.memory_space<vmem>>, vector<8x16xf32>
    tpu.vector_store %arg11[%c0_14, %c4_15], %16 {strides = array<i32>} : memref<8x20xf32, #tpu.memory_space<vmem>>, vector<8x16xf32>,
    %c0_16 = arith.constant 0 : index
    %c0_17 = arith.constant 0 : index
    %18 = vector.load %arg11[%c0_16, %c0_17] : memref<8x20xf32, #tpu.memory_space<vmem>>, vector<8x16xf32>
    %c0_18 = arith.constant 0 : index
    %c2_19 = arith.constant 2 : index
    %19 = vector.load %arg11[%c0_18, %c2_19] : memref<8x20xf32, #tpu.memory_space<vmem>>, vector<8x16xf32>
    %c0_20 = arith.constant 0 : index
    %c4_21 = arith.constant 4 : index
    %20 = vector.load %arg11[%c0_20, %c4_21] : memref<8x20xf32, #tpu.memory_space<vmem>>, vector<8x16xf32>
    %21 = tpu.concatenate %18, %19, %20 in 0 : vector<8x16xf32>, vector<8x16xf32>, vector<8x16xf32> -> vector<24x16xf32>
    %c0_22 = arith.constant 0 : index
    %c0_23 = arith.constant 0 : index
    %22 = vector.load %arg5[%c0_22, %c0_23] : memref<8x24xf32, #tpu.memory_space<vmem>>, vector<8x24xf32>
    %cst_24 = arith.constant dense<0.000000e+00> : vector<8x16xf32>
    %23 = tpu.matmul %22, %21, %cst_24 {dimension_numbers = #tpu.dot_dimension_numbers<[1], [0], [0], [1], [0, 0, 1, 1], [], []>} : vector<8x24xf32>, vector<24x16xf32>, vector<8x16xf32> -> vector<8x16xf32>
    %c0_25 = arith.constant 0 : index
    %c0_26 = arith.constant 0 : index
    %24 = vector.load %arg6[%c0_25, %c0_26] : memref<8x1xf32, #tpu.memory_space<vmem>>, vector<8x1xf32>
    %25 = vector.broadcast %24 : vector<8x1xf32> to vector<8x16xf32>
    %26 = arith.addf %23, %25 : vector<8x16xf32>
    %cst_27 = arith.constant 0.000000e+00 : f32
    %27 = vector.broadcast %cst_27 : f32 to vector<8x16xf32>
    %28 = arith.maximumf %26, %27 : vector<8x16xf32>
    %c0_28 = arith.constant 0 : index
    %c4_29 = arith.constant 4 : index
    %29 = vector.load %arg10[%c0_28, %c4_29] : memref<8x20xf32, #tpu.memory_space<vmem>>, vector<8x16xf32>
    %c0_30 = arith.constant 0 : index
    %c0_31 = arith.constant 0 : index
    %30 = vector.load %arg7[%c0_30, %c0_31] : memref<8x8xf32, #tpu.memory_space<vmem>>, vector<8x8xf32>
    %cst_32 = arith.constant dense<0.000000e+00> : vector<8x16xf32>
    %31 = tpu.matmul %30, %29, %cst_32 {dimension_numbers = #tpu.dot_dimension_numbers<[1], [0], [0], [1], [0, 0, 1, 1], [], []>} : vector<8x8xf32>, vector<8x16xf32>, vector<8x16xf32> -> vector<8x16xf32>
    %c0_33 = arith.constant 0 : index
    %c0_34 = arith.constant 0 : index
    %32 = vector.load %arg8[%c0_33, %c0_34] : memref<8x1xf32, #tpu.memory_space<vmem>>, vector<8x1xf32>
    %33 = vector.broadcast %32 : vector<8x1xf32> to vector<8x16xf32>
    %34 = arith.addf %31, %33 : vector<8x16xf32>
    %35 = arith.addf %28, %34 : vector<8x16xf32>
    %cst_35 = arith.constant 0.000000e+00 : f32
    %36 = vector.broadcast %cst_35 : f32 to vector<8x16xf32>
    %37 = arith.maximumf %35, %36 : vector<8x16xf32>
    %c0_36 = arith.constant 0 : index
    %c0_37 = arith.constant 0 : index
    %c0_38 = arith.constant 0 : index
    %38 = vector.load %arg9[%c0_36, %c0_37, %c0_38] : memref<1x8x16xf32, #tpu.memory_space<vmem>>, vector<1x8x16xf32>
    %39 = vector.shape_cast %38 : vector<1x8x16xf32> to vector<8x16xf32>
    %40 = vector.shape_cast %37 : vector<8x16xf32> to vector<1x8x16xf32>
    tpu.vector_store %arg9[%c0_36, %c0_37, %c0_38], %40 {strides = array<i32>} : memref<1x8x16xf32, #tpu.memory_space<vmem>>, vector<1x8x16xf32>,
    %c1_i32 = arith.constant 1 : i32
    %41 = arith.addi %arg1, %c1_i32 : i32
    %c1_i32_39 = arith.constant 1 : i32
    %42 = arith.cmpi slt, %41, %c1_i32_39 : i32
    %43 = arith.extui %42 : i1 to i32
    %c0_i32_40 = arith.constant 0 : i32
    %44 = arith.cmpi ne, %43, %c0_i32_40 : i32
    scf.if %44 {
      %c0_41 = arith.constant 0 : index
      %c16 = arith.constant 16 : index
      %45 = vector.load %arg10[%c0_41, %c16] : memref<8x20xf32, #tpu.memory_space<vmem>>, vector<8x4xf32>
      %c0_42 = arith.constant 0 : index
      %c0_43 = arith.constant 0 : index
      %46 = vector.load %arg10[%c0_42, %c0_43] : memref<8x20xf32, #tpu.memory_space<vmem>>, vector<8x4xf32>
      tpu.vector_store %arg10[%c0_42, %c0_43], %45 {strides = array<i32>} : memref<8x20xf32, #tpu.memory_space<vmem>>, vector<8x4xf32>,
      %c0_44 = arith.constant 0 : index
      %c16_45 = arith.constant 16 : index
      %47 = vector.load %arg11[%c0_44, %c16_45] : memref<8x20xf32, #tpu.memory_space<vmem>>, vector<8x4xf32>
      %c0_46 = arith.constant 0 : index
      %c0_47 = arith.constant 0 : index
      %48 = vector.load %arg11[%c0_46, %c0_47] : memref<8x20xf32, #tpu.memory_space<vmem>>, vector<8x4xf32>
      tpu.vector_store %arg11[%c0_46, %c0_47], %47 {strides = array<i32>} : memref<8x20xf32, #tpu.memory_space<vmem>>, vector<8x4xf32>,
    } else {
    }
    return
  }
  func.func @transform_0(%arg0: i32, %arg1: i32) -> (i32, i32, i32) {
    %c0_i32 = arith.constant 0 : i32
    %c0_i32_0 = arith.constant 0 : i32
    return %arg0, %c0_i32, %arg1 : i32, i32, i32
  }
  func.func @transform_1(%arg0: i32, %arg1: i32) -> (i32, i32) {
    %c0_i32 = arith.constant 0 : i32
    %c0_i32_0 = arith.constant 0 : i32
    %c0_i32_1 = arith.constant 0 : i32
    return %c0_i32, %c0_i32_0 : i32, i32
  }
  func.func @transform_2(%arg0: i32, %arg1: i32) -> (i32, i32) {
    %c0_i32 = arith.constant 0 : i32
    %c0_i32_0 = arith.constant 0 : i32
    %c0_i32_1 = arith.constant 0 : i32
    return %c0_i32, %c0_i32_0 : i32, i32
  }
  func.func @transform_3(%arg0: i32, %arg1: i32) -> (i32, i32) {
    %c0_i32 = arith.constant 0 : i32
    %c0_i32_0 = arith.constant 0 : i32
    %c0_i32_1 = arith.constant 0 : i32
    return %c0_i32, %c0_i32_0 : i32, i32
  }
  func.func @transform_4(%arg0: i32, %arg1: i32) -> (i32, i32) {
    %c0_i32 = arith.constant 0 : i32
    %c0_i32_0 = arith.constant 0 : i32
    %c0_i32_1 = arith.constant 0 : i32
    return %c0_i32, %c0_i32_0 : i32, i32
  }
  func.func @transform_5(%arg0: i32, %arg1: i32) -> (i32, i32) {
    %c0_i32 = arith.constant 0 : i32
    %c0_i32_0 = arith.constant 0 : i32
    %c0_i32_1 = arith.constant 0 : i32
    return %c0_i32, %c0_i32_0 : i32, i32
  }
  func.func @transform_6(%arg0: i32, %arg1: i32) -> (i32, i32) {
    %c0_i32 = arith.constant 0 : i32
    %c0_i32_0 = arith.constant 0 : i32
    %c0_i32_1 = arith.constant 0 : i32
    return %c0_i32, %c0_i32_0 : i32, i32
  }
  func.func @transform_7(%arg0: i32, %arg1: i32) -> (i32, i32, i32) {
    %c0_i32 = arith.constant 0 : i32
    %c0_i32_0 = arith.constant 0 : i32
    return %arg0, %c0_i32, %arg1 : i32, i32, i32
  }
}

</mosaic_0001>

<llo_original>
// kernel: tpu_custom_call.1
$region0: #{tpu_custom_call.1}
  #allocation0 [shape = 'u32[]', space=smem, size = 0x4, offset = 0x4, fixed_abs, tag = 'smem constant byte address 0x4 - core index']
  #allocation1 [shape = 'u32[72,128]{1,0:T(1,128)}', space=vmem, size = 0x9000, scoped, tag = 'internal scratch']
  #allocation2 [shape = 'f32[8,20]{1,0:T(8,128)}', space=vmem, size = 0x1000, scoped, tag = 'scratch operand']
  #allocation3 [shape = 'f32[8,20]{1,0:T(8,128)}', space=vmem, size = 0x1000, scoped, tag = 'scratch operand']
  %s0 = inlined_call_operand.vmem [shape: f32[2,4,16], index: 0, kind: input, shape index: {}]
  %s1 = inlined_call_operand.vmem [shape: f32[8,24], index: 1, kind: input, shape index: {}]
  %s2 = inlined_call_operand.vmem [shape: f32[8,1], index: 2, kind: input, shape index: {}]
  %s3 = inlined_call_operand.vmem [shape: f32[8,24], index: 3, kind: input, shape index: {}]
  %s4 = inlined_call_operand.vmem [shape: f32[8,1], index: 4, kind: input, shape index: {}]
  %s5 = inlined_call_operand.hbm [shape: f32[8,8], index: 5, kind: input, shape index: {}]
  %s6 = inlined_call_operand.vmem [shape: f32[8,1], index: 6, kind: input, shape index: {}]
  %s7 = inlined_call_operand.hbm [shape: f32[2,8,16], index: 7, kind: output, shape index: {}]
  %s8 = sld [smem:[#allocation0]]
  $region73: #{tpu_custom_call.1} parent=0
    _
  %s10 = ssub.s32 1, %s8
  %s11 = scalar_select 0, %s10, %s8
  $region1: #{tpu_custom_call.1} parent=0
    #allocation4 [shape = 'u8[4096]{0}', space=vmem, size = 0x1000, scoped, tag = 'input window, operand 5, single buffered']
    #allocation5 [shape = 's32[2]{0}', space=sflag, size = 0x8, scoped, tag = 'scoped memory for tpu_custom_call.1']
    #allocation6 [shape = 's32[2]{0}', space=sflag, size = 0x8, scoped, tag = 'scoped memory for tpu_custom_call.1']
    #allocation7 [shape = 'u8[8192]{0}', space=vmem, size = 0x2000, scoped, tag = 'output window, operand 0']
    %12 = vsyncpa [#allocation5], 0
    %13 = vsyncpa [#allocation6], 0
    %s14 = scalar_lea.sflag [#allocation6], 1
    %15 = vsyncpa %s14, 0
    loop: start=0, step=1, limit=4
    $region2: #{tpu_custom_call.1} parent=1 // loop_pre_header
      _
    $region3: #{tpu_custom_call.1} parent=1 // loop_header
      %s17 = sphi 0, %s21
      %p18 = scmp.ge.s32.totalorder %s17, 4
      %s24 = sphi 0, %s36
      %s25 = sphi 0, %s32
      %s26 = sphi 0, %s24
      %s27 = sphi 0, %s25
      %s28 = sphi 0, %s26
      %s29 = sphi 0, %s27
      %s41 = sphi 0, %s43
      %s44 = sphi 0, %s41
      %s45 = sphi 0, %s44
      %s61 = sphi 0, %s45
      %s65 = sphi 0, %s65
      %s67 = sphi 0, %s65
      %s68 = sphi 0, %s67
      %s82 = sphi 0, %s68
      %s86 = sphi 0, %s86
      %s88 = sphi 0, %s86
      %s89 = sphi 0, %s88
      %s103 = sphi 0, %s89
      %s107 = sphi 0, %s107
      %s109 = sphi 0, %s107
      %s110 = sphi 0, %s109
      %s124 = sphi 0, %s110
      %s128 = sphi 0, %s128
      %s130 = sphi 0, %s128
      %s131 = sphi 0, %s130
      %s145 = sphi 0, %s131
      %s149 = sphi 0, %s149
      %s151 = sphi 0, %s149
      %s152 = sphi 0, %s151
      %s166 = sphi 0, %s152
      %s170 = sphi 0, %s170
      %s172 = sphi 0, %s170
      %s173 = sphi 0, %s172
      %s187 = sphi 0, %s173
      %s195 = sphi 0, %s197
      %s198 = sphi 0, %s195
      %s199 = sphi 0, %s198
      %s215 = sphi 0, %s199
    $region4: #{tpu_custom_call.1} parent=1 // loop_header_branch
      %20 = sbr.rel (%p18) target = $region8
    $region5: #{tpu_custom_call.1} parent=1 // loop_body
      %s22 = ssub.s32 %s17, 1
      %s23 = ssub.s32 %s17, 2
      %s30 = sadd.s32 1, %s25
      %p31 = scmp.ge.s32.totalorder %s30, 1
      %s32 = scalar_select %p31, 0, %s30
      %s33 = sadd.s32 1, %s24
      %s34 = scalar_select %p31, %s33, %s24
      %p35 = scmp.ge.s32.totalorder %s34, 2
      %s36 = scalar_select %p35, 0, %s34
      %s37 = ssub.s32 %s24, %s36
      %s38 = ssub.s32 %s25, %s32
      %s39 = sor.u32 %s37, %s38
      %p40 = scmp.eq.s32.totalorder %s39, 0
      %s42 = sadd.s32 %s41, 1
      %s43 = scalar_select %p40, %s41, %s42
      %p46 = pneg %p40
      %p47 = scmp.eq.s32.totalorder %s17, 1
      %p48 = por %p46, %p47
      %p49 = scmp.ne.s32.totalorder %s41, %s44
      %p50 = scmp.eq.s32.totalorder %s17, 0
      %p51 = por %p49, %p50
      %p52 = scmp.ne.s32.totalorder %s41, %s44
      %p53 = scmp.eq.s32.totalorder %s22, 1
      %p54 = por %p52, %p53
      %p55 = scmp.ne.s32.totalorder %s44, %s45
      %p56 = scmp.eq.s32.totalorder %s22, 0
      %p57 = por %p55, %p56
      %p58 = scmp.ne.s32.totalorder %s44, %s45
      %p59 = scmp.eq.s32.totalorder %s23, 1
      %p60 = por %p58, %p59
      %p62 = scmp.ne.s32.totalorder %s45, %s61
      %p63 = scmp.eq.s32.totalorder %s23, 0
      %p64 = por %p62, %p63
      %s66 = sadd.s32 %s65, 1
      %p69 = scmp.eq.s32.totalorder %s17, 1
      %p70 = scmp.ne.s32.totalorder %s65, %s67
      %p71 = scmp.eq.s32.totalorder %s17, 0
      %p72 = por %p70, %p71
      %p73 = scmp.ne.s32.totalorder %s65, %s67
      %p74 = scmp.eq.s32.totalorder %s22, 1
      %p75 = por %p73, %p74
      %p76 = scmp.ne.s32.totalorder %s67, %s68
      %p77 = scmp.eq.s32.totalorder %s22, 0
      %p78 = por %p76, %p77
      %p79 = scmp.ne.s32.totalorder %s67, %s68
      %p80 = scmp.eq.s32.totalorder %s23, 1
      %p81 = por %p79, %p80
      %p83 = scmp.ne.s32.totalorder %s68, %s82
      %p84 = scmp.eq.s32.totalorder %s23, 0
      %p85 = por %p83, %p84
      %s87 = sadd.s32 %s86, 1
      %p90 = scmp.eq.s32.totalorder %s17, 1
      %p91 = scmp.ne.s32.totalorder %s86, %s88
      %p92 = scmp.eq.s32.totalorder %s17, 0
      %p93 = por %p91, %p92
      %p94 = scmp.ne.s32.totalorder %s86, %s88
      %p95 = scmp.eq.s32.totalorder %s22, 1
      %p96 = por %p94, %p95
      %p97 = scmp.ne.s32.totalorder %s88, %s89
      %p98 = scmp.eq.s32.totalorder %s22, 0
      %p99 = por %p97, %p98
      %p100 = scmp.ne.s32.totalorder %s88, %s89
      %p101 = scmp.eq.s32.totalorder %s23, 1
      %p102 = por %p100, %p101
      %p104 = scmp.ne.s32.totalorder %s89, %s103
      %p105 = scmp.eq.s32.totalorder %s23, 0
      %p106 = por %p104, %p105
      %s108 = sadd.s32 %s107, 1
      %p111 = scmp.eq.s32.totalorder %s17, 1
      %p112 = scmp.ne.s32.totalorder %s107, %s109
      %p113 = scmp.eq.s32.totalorder %s17, 0
      %p114 = por %p112, %p113
      %p115 = scmp.ne.s32.totalorder %s107, %s109
      %p116 = scmp.eq.s32.totalorder %s22, 1
      %p117 = por %p115, %p116
      %p118 = scmp.ne.s32.totalorder %s109, %s110
      %p119 = scmp.eq.s32.totalorder %s22, 0
      %p120 = por %p118, %p119
      %p121 = scmp.ne.s32.totalorder %s109, %s110
      %p122 = scmp.eq.s32.totalorder %s23, 1
      %p123 = por %p121, %p122
      %p125 = scmp.ne.s32.totalorder %s110, %s124
      %p126 = scmp.eq.s32.totalorder %s23, 0
      %p127 = por %p125, %p126
      %s129 = sadd.s32 %s128, 1
      %p132 = scmp.eq.s32.totalorder %s17, 1
      %p133 = scmp.ne.s32.totalorder %s128, %s130
      %p134 = scmp.eq.s32.totalorder %s17, 0
      %p135 = por %p133, %p134
      %p136 = scmp.ne.s32.totalorder %s128, %s130
      %p137 = scmp.eq.s32.totalorder %s22, 1
      %p138 = por %p136, %p137
      %p139 = scmp.ne.s32.totalorder %s130, %s131
      %p140 = scmp.eq.s32.totalorder %s22, 0
      %p141 = por %p139, %p140
      %p142 = scmp.ne.s32.totalorder %s130, %s131
      %p143 = scmp.eq.s32.totalorder %s23, 1
      %p144 = por %p142, %p143
      %p146 = scmp.ne.s32.totalorder %s131, %s145
      %p147 = scmp.eq.s32.totalorder %s23, 0
      %p148 = por %p146, %p147
      %s150 = sadd.s32 %s149, 1
      %p153 = scmp.eq.s32.totalorder %s17, 1
      %p154 = scmp.ne.s32.totalorder %s149, %s151
      %p155 = scmp.eq.s32.totalorder %s17, 0
      %p156 = por %p154, %p155
      %p157 = scmp.ne.s32.totalorder %s149, %s151
      %p158 = scmp.eq.s32.totalorder %s22, 1
      %p159 = por %p157, %p158
      %p160 = scmp.ne.s32.totalorder %s151, %s152
      %p161 = scmp.eq.s32.totalorder %s22, 0
      %p162 = por %p160, %p161
      %p163 = scmp.ne.s32.totalorder %s151, %s152
      %p164 = scmp.eq.s32.totalorder %s23, 1
      %p165 = por %p163, %p164
      %p167 = scmp.ne.s32.totalorder %s152, %s166
      %p168 = scmp.eq.s32.totalorder %s23, 0
      %p169 = por %p167, %p168
      %s171 = sadd.s32 %s170, 1
      %p174 = scmp.eq.s32.totalorder %s17, 1
      %p175 = scmp.ne.s32.totalorder %s170, %s172
      %p176 = scmp.eq.s32.totalorder %s17, 0
      %p177 = por %p175, %p176
      %p178 = scmp.ne.s32.totalorder %s170, %s172
      %p179 = scmp.eq.s32.totalorder %s22, 1
      %p180 = por %p178, %p179
      %p181 = scmp.ne.s32.totalorder %s172, %s173
      %p182 = scmp.eq.s32.totalorder %s22, 0
      %p183 = por %p181, %p182
      %p184 = scmp.ne.s32.totalorder %s172, %s173
      %p185 = scmp.eq.s32.totalorder %s23, 1
      %p186 = por %p184, %p185
      %p188 = scmp.ne.s32.totalorder %s173, %s187
      %p189 = scmp.eq.s32.totalorder %s23, 0
      %p190 = por %p188, %p189
      %s191 = ssub.s32 %s24, %s36
      %s192 = ssub.s32 %s25, %s32
      %s193 = sor.u32 %s191, %s192
      %p194 = scmp.eq.s32.totalorder %s193, 0
      %s196 = sadd.s32 %s195, 1
      %s197 = scalar_select %p194, %s195, %s196
      %p200 = pneg %p194
      %p201 = scmp.eq.s32.totalorder %s17, 1
      %p202 = por %p200, %p201
      %p203 = scmp.ne.s32.totalorder %s195, %s198
      %p204 = scmp.eq.s32.totalorder %s17, 0
      %p205 = por %p203, %p204
      %p206 = scmp.ne.s32.totalorder %s195, %s198
      %p207 = scmp.eq.s32.totalorder %s22, 1
      %p208 = por %p206, %p207
      %p209 = scmp.ne.s32.totalorder %s198, %s199
      %p210 = scmp.eq.s32.totalorder %s22, 0
      %p211 = por %p209, %p210
      %p212 = scmp.ne.s32.totalorder %s198, %s199
      %p213 = scmp.eq.s32.totalorder %s23, 1
      %p214 = por %p212, %p213
      %p216 = scmp.ne.s32.totalorder %s199, %s215
      %p217 = scmp.eq.s32.totalorder %s23, 0
      %p218 = por %p216, %p217
      %p219 = scmp.le.s32.totalorder 1, %s17
      %p220 = scmp.lt.s32.totalorder %s17, 3
      %p221 = pnand %p219, %p220
      %p222 = pneg %p221
      // Predicated region
      $region9: #{tpu_custom_call.1} parent=5 // pred_check
        _
      $region10: #{tpu_custom_call.1} parent=5 // pred_check_branch
        %224 = sbr.rel (%p221) target = $region12
      $region11: #{tpu_custom_call.1} parent=5 // pred_region
        %s225 = ssub.s32 %s17, 1
        // Predicated region
        $region13: #{tpu_custom_call.1} parent=11 // pred_check
          %p226 = pneg %p78
        $region14: #{tpu_custom_call.1} parent=11 // pred_check_branch
          %228 = sbr.rel (%p226) target = $region16
        $region15: #{tpu_custom_call.1} parent=11 // pred_region
          _
        $region16: #{tpu_custom_call.1} parent=11 // pred_fallthru
          _
        // Predicated region
        $region17: #{tpu_custom_call.1} parent=11 // pred_check
          %p229 = pneg %p99
        $region18: #{tpu_custom_call.1} parent=11 // pred_check_branch
          %231 = sbr.rel (%p229) target = $region20
        $region19: #{tpu_custom_call.1} parent=11 // pred_region
          _
        $region20: #{tpu_custom_call.1} parent=11 // pred_fallthru
          _
        // Predicated region
        $region21: #{tpu_custom_call.1} parent=11 // pred_check
          %p232 = pneg %p120
        $region22: #{tpu_custom_call.1} parent=11 // pred_check_branch
          %234 = sbr.rel (%p232) target = $region24
        $region23: #{tpu_custom_call.1} parent=11 // pred_region
          _
        $region24: #{tpu_custom_call.1} parent=11 // pred_fallthru
          _
        // Predicated region
        $region25: #{tpu_custom_call.1} parent=11 // pred_check
          %p235 = pneg %p141
        $region26: #{tpu_custom_call.1} parent=11 // pred_check_branch
          %237 = sbr.rel (%p235) target = $region28
        $region27: #{tpu_custom_call.1} parent=11 // pred_region
          _
        $region28: #{tpu_custom_call.1} parent=11 // pred_fallthru
          _
        // Predicated region
        $region29: #{tpu_custom_call.1} parent=11 // pred_check
          %p238 = pneg %p162
        $region30: #{tpu_custom_call.1} parent=11 // pred_check_branch
          %240 = sbr.rel (%p238) target = $region32
        $region31: #{tpu_custom_call.1} parent=11 // pred_region
          %242 = vsyncadd [#allocation5], 0
          %s244 = sshll.u32 %s5, 4
          %s245 = int_to_ptr.hbm [resolvable:$true] %s244
          %s246 = sshll.u32 [#allocation4], 4
          %s247 = int_to_ptr.vmem [resolvable:$true] %s246
          %249 = dma.hbm_to_vmem [thread:$0]  %s245, 128, %s247, [#allocation5]
        $region32: #{tpu_custom_call.1} parent=11 // pred_fallthru
          _
        // Predicated region
        $region33: #{tpu_custom_call.1} parent=11 // pred_check
          %p250 = pneg %p183
        $region34: #{tpu_custom_call.1} parent=11 // pred_check_branch
          %252 = sbr.rel (%p250) target = $region36
        $region35: #{tpu_custom_call.1} parent=11 // pred_region
          _
        $region36: #{tpu_custom_call.1} parent=11 // pred_fallthru
          _
      $region12: #{tpu_custom_call.1} parent=5 // pred_fallthru
        _
      %p253 = scmp.lt.s32.totalorder %s17, 2
      // Predicated region
      $region37: #{tpu_custom_call.1} parent=5 // pred_check
        %p254 = pneg %p253
      $region38: #{tpu_custom_call.1} parent=5 // pred_check_branch
        %256 = sbr.rel (%p254) target = $region40
      $region39: #{tpu_custom_call.1} parent=5 // pred_region
        // Predicated region
        $region41: #{tpu_custom_call.1} parent=39 // pred_check
          %p257 = pneg %p51
        $region42: #{tpu_custom_call.1} parent=39 // pred_check_branch
          %259 = sbr.rel (%p257) target = $region44
        $region43: #{tpu_custom_call.1} parent=39 // pred_region
          %p260 = scmp.lt.s32.totalorder %s24, 1
          %s261 = scalar_select %p260, %s24, 1
          %p262 = scmp.lt.s32.totalorder %s25, 0
          %s263 = scalar_select %p262, %s25, 0
          %s264 = sadd.s32 %s263, %s261
          %s265 = smul.addr %s264, 4
          %s266 = scalar_lea.vmem %s0, %s265
        $region44: #{tpu_custom_call.1} parent=39 // pred_fallthru
          _
      $region40: #{tpu_custom_call.1} parent=5 // pred_fallthru
        _
      %p267 = scmp.le.s32.totalorder 1, %s17
      %p268 = scmp.lt.s32.totalorder %s17, 3
      %p269 = pnand %p267, %p268
      %p270 = pneg %p269
      // Predicated region
      $region45: #{tpu_custom_call.1} parent=5 // pred_check
        _
      $region46: #{tpu_custom_call.1} parent=5 // pred_check_branch
        %272 = sbr.rel (%p269) target = $region48
      $region47: #{tpu_custom_call.1} parent=5 // pred_region
        %s273 = ssub.s32 %s17, 1
        // Predicated region
        $region49: #{tpu_custom_call.1} parent=47 // pred_check
          %p274 = pneg %p162
        $region50: #{tpu_custom_call.1} parent=47 // pred_check_branch
          %276 = sbr.rel (%p274) target = $region52
        $region51: #{tpu_custom_call.1} parent=47 // pred_region
          %278 = dma.done [#allocation5], 128
        $region52: #{tpu_custom_call.1} parent=47 // pred_fallthru
          _
        %p279 = scmp.lt.s32.totalorder %s26, 1
        %s280 = scalar_select %p279, %s26, 1
        %p281 = scmp.lt.s32.totalorder %s27, 0
        %s282 = scalar_select %p281, %s27, 0
        %s283 = sadd.s32 %s282, %s280
        %s284 = smul.addr %s283, 4
        %s285 = scalar_lea.vmem %s0, %s284
        %p286 = pneg %p57
        %p287 = pneg %p54
        %p288 = pneg %p78
        %p289 = pneg %p75
        %p290 = pneg %p99
        %p291 = pneg %p96
        %p292 = pneg %p120
        %p293 = pneg %p117
        %p294 = pneg %p141
        %p295 = pneg %p138
        %p296 = pneg %p162
        %p297 = pneg %p159
        %p298 = pneg %p183
        %p299 = pneg %p180
        %p300 = pneg %p211
        %p301 = pneg %p208
        %s302 = sand.u32 %s198, 1
        %s303 = scalar_lea.sflag [#allocation6], %s302
        %s304 = sand.u32 %s198, 1
        %s305 = smul.addr %s304, 8
        %s306 = scalar_lea.vmem [#allocation7], %s305
        %p307 = scmp.lt.s32.totalorder %s26, 1
        %s308 = scalar_select %p307, %s26, 1
        %p309 = scmp.lt.s32.totalorder %s27, 0
        %s310 = scalar_select %p309, %s27, 0
        %s311 = sadd.s32 %s310, %s308
        %s312 = smul.addr %s311, 4
        %s313 = scalar_lea.vmem %s0, %s312
        %p314 = scmp.eq.s32.totalorder %s27, 0
        // Predicated region
        $region53: #{tpu_custom_call.1} parent=47 // pred_check
          %p315 = pneg %p314
        $region54: #{tpu_custom_call.1} parent=47 // pred_check_branch
          %317 = sbr.rel (%p315) target = $region56
        $region55: #{tpu_custom_call.1} parent=47 // pred_region
          %vm318 = vcmask 162816
          %319 = vst.msk [vmem:[#allocation2] sm:$0xff] %vm318, 0.0
          %320 = vst.msk [vmem:[#allocation3] sm:$0xff] %vm318, 0.0
        $region56: #{tpu_custom_call.1} parent=47 // pred_fallthru
          _
        %v321 = vld [vmem:[%s313] sm:$0xf]
        %323 = vrot.lane.b32.xlu0 %v321, 4
        %v324 = vpop.permute.xlu0 %323
        %vm326 = vcmask 158752
        %327 = vst.msk [vmem:[#allocation2] sm:$0xf] %vm326, %v324
        %v328 = vld [vmem:[#allocation2] sm:$0xff]
        %330 = vrot.lane.b32.xlu0 %v328, 126
        %v331 = vpop.permute.xlu0 %330
        %333 = vrot.lane.b32.xlu0 %v328, 124
        %v334 = vpop.permute.xlu0 %333
        %v336 = vld [vmem:[%s1] sm:$0xff]
        %v337 = vld [vmem:[%s2] sm:$0xff]
        %339 = vset.pattern.permute.xlu0 0
        %340 = vperm.xlu0 %339, %v337
        %v341 = vpop.permute.xlu0 %340
        %vm343 = vcmask 195584
        %v345 = vsel %vm343, %v336, 0
        %347 = vmatpush.msra.mxu0 0.0
        %348 = vmatpush.msra.mxu0 0.0
        %349 = vmatpush.msra.mxu0 0.0
        %350 = vmatpush.msra.mxu0 0.0
        %351 = vmatpush.msra.mxu0 0.0
        %352 = vmatpush.msra.mxu0 0.0
        %353 = vmatpush.msra.mxu0 0.0
        %354 = vmatpush.msra.mxu0 0.0
        %355 = vmatpush.msra.mxu0 0.0
        %356 = vmatpush.msra.mxu0 0.0
        %357 = vmatpush.msra.mxu0 0.0
        %358 = vmatpush.msra.mxu0 0.0
        %359 = vmatpush.msra.mxu0 0.0
        %360 = vmatpush.msra.mxu0 %v334
        %361 = vmatpush.msra.mxu0 %v331
        %362 = vmatpush.msra.mxu0 %v328
        %363 = vmatmul.f32.gmra.mxu0 %v345
        %v364 = vpop.f32.mrf.mxu0
        %v365 = vadd.f32 %v341, %v364
        %366 = vdwg.mxu0
        %v367 = vmax.f32 %v365, 0.0
        %369 = vrot.lane.b32.xlu0 %v367, 4
        %v370 = vpop.permute.xlu0 %369
        %vm372 = vcmask 162848
        %373 = vst.msk [vmem:[#allocation3] sm:$0xff] %vm372, %v370
        %v374 = vld [vmem:[#allocation3] sm:$0xff]
        %376 = vrot.lane.b32.xlu0 %v374, 126
        %v377 = vpop.permute.xlu0 %376
        %379 = vrot.lane.b32.xlu0 %v374, 124
        %v380 = vpop.permute.xlu0 %379
        %v382 = vld [vmem:[%s3] sm:$0xff]
        %v383 = vld [vmem:[%s4] sm:$0xff]
        %385 = vset.pattern.permute.xlu0 0
        %386 = vperm.xlu0 %385, %v383
        %v387 = vpop.permute.xlu0 %386
        %v390 = vsel %vm343, %v382, 0
        %392 = vmatpush.msra.mxu0 0.0
        %393 = vmatpush.msra.mxu0 0.0
        %394 = vmatpush.msra.mxu0 0.0
        %395 = vmatpush.msra.mxu0 0.0
        %396 = vmatpush.msra.mxu0 0.0
        %397 = vmatpush.msra.mxu0 0.0
        %398 = vmatpush.msra.mxu0 0.0
        %399 = vmatpush.msra.mxu0 0.0
        %400 = vmatpush.msra.mxu0 0.0
        %401 = vmatpush.msra.mxu0 0.0
        %402 = vmatpush.msra.mxu0 0.0
        %403 = vmatpush.msra.mxu0 0.0
        %404 = vmatpush.msra.mxu0 0.0
        %405 = vmatpush.msra.mxu0 %v380
        %406 = vmatpush.msra.mxu0 %v377
        %407 = vmatpush.msra.mxu0 %v374
        %408 = vmatmul.f32.gmra.mxu0 %v390
        %v409 = vpop.f32.mrf.mxu0
        %v410 = vadd.f32 %v387, %v409
        %411 = vdwg.mxu0
        %v412 = vmax.f32 %v410, 0.0
        %v413 = vld [vmem:[#allocation2] sm:$0xff]
        %v414 = vld [vmem:[#allocation4] sm:$0xff]
        %v415 = vld [vmem:[%s6] sm:$0xff]
        %417 = vset.pattern.permute.xlu0 0
        %418 = vperm.xlu0 %417, %v415
        %v419 = vpop.permute.xlu0 %418
        %422 = vrot.lane.b32.xlu0 %v413, 124
        %v423 = vpop.permute.xlu0 %422
        %vm425 = vcmask 64512
        %v427 = vsel %vm425, %v414, 0
        %429 = vmatpush.msra.mxu0 0.0
        %430 = vmatpush.msra.mxu0 0.0
        %431 = vmatpush.msra.mxu0 0.0
        %432 = vmatpush.msra.mxu0 0.0
        %433 = vmatpush.msra.mxu0 0.0
        %434 = vmatpush.msra.mxu0 0.0
        %435 = vmatpush.msra.mxu0 0.0
        %436 = vmatpush.msra.mxu0 0.0
        %437 = vmatpush.msra.mxu0 0.0
        %438 = vmatpush.msra.mxu0 0.0
        %439 = vmatpush.msra.mxu0 0.0
        %440 = vmatpush.msra.mxu0 0.0
        %441 = vmatpush.msra.mxu0 0.0
        %442 = vmatpush.msra.mxu0 0.0
        %443 = vmatpush.msra.mxu0 0.0
        %444 = vmatpush.msra.mxu0 %v423
        %445 = vmatmul.f32.gmra.mxu0 %v427
        %v446 = vpop.f32.mrf.mxu0
        %v447 = vadd.f32 %v419, %v446
        %448 = vdwg.mxu0
        %v449 = vadd.f32 %v412, %v447
        %v450 = vmax.f32 %v449, 0.0
        %vm451 = vcmask 130048
        %452 = vst.msk [vmem:[%s306] sm:$0xff] %vm451, %v450
        %s453 = sadd.s32 %s27, 1
        %p454 = scmp.lt.s32.totalorder %s453, 1
        // Predicated region
        $region57: #{tpu_custom_call.1} parent=47 // pred_check
          %p455 = pneg %p454
        $region58: #{tpu_custom_call.1} parent=47 // pred_check_branch
          %457 = sbr.rel (%p455) target = $region60
        $region59: #{tpu_custom_call.1} parent=47 // pred_region
          %v458 = vld [vmem:[#allocation2] sm:$0xff]
          %460 = vrot.lane.b32.xlu0 %v458, 112
          %v461 = vpop.permute.xlu0 %460
          %vm463 = vcmask 31744
          %464 = vst.msk [vmem:[#allocation2] sm:$0xff] %vm463, %v461
          %v465 = vld [vmem:[#allocation3] sm:$0xff]
          %467 = vrot.lane.b32.xlu0 %v465, 112
          %v468 = vpop.permute.xlu0 %467
          %470 = vst.msk [vmem:[#allocation3] sm:$0xff] %vm463, %v468
        $region60: #{tpu_custom_call.1} parent=47 // pred_fallthru
          _
        %s471 = sand.u32 %s198, 1
        %s472 = scalar_lea.sflag [#allocation6], %s471
        %s473 = sand.u32 %s198, 1
        %s474 = smul.addr %s473, 8
        %s475 = scalar_lea.vmem [#allocation7], %s474
        // Predicated region
        $region61: #{tpu_custom_call.1} parent=47 // pred_check
          %p476 = pneg %p208
        $region62: #{tpu_custom_call.1} parent=47 // pred_check_branch
          %478 = sbr.rel (%p476) target = $region64
        $region63: #{tpu_custom_call.1} parent=47 // pred_region
          %480 = vsyncadd %s472, 0
          %s481 = sadd.s32 %s27, %s26
          %s482 = smul.addr %s481, 8
          %s483 = scalar_lea.hbm %s7, %s482
          %s485 = sshll.u32 %s475, 4
          %s486 = int_to_ptr.vmem [resolvable:$true] %s485
          %s487 = sshll.u32 %s483, 4
          %s488 = int_to_ptr.hbm [resolvable:$true] %s487
          %490 = dma.vmem_to_hbm [thread:$0]  %s486, 128, %s488, %s472
        $region64: #{tpu_custom_call.1} parent=47 // pred_fallthru
          _
      $region48: #{tpu_custom_call.1} parent=5 // pred_fallthru
        _
      %p491 = scmp.le.s32.totalorder 2, %s17
      // Predicated region
      $region65: #{tpu_custom_call.1} parent=5 // pred_check
        %p492 = pneg %p491
      $region66: #{tpu_custom_call.1} parent=5 // pred_check_branch
        %494 = sbr.rel (%p492) target = $region68
      $region67: #{tpu_custom_call.1} parent=5 // pred_region
        %s495 = ssub.s32 %s17, 2
        // Predicated region
        $region69: #{tpu_custom_call.1} parent=67 // pred_check
          %p496 = pneg %p214
        $region70: #{tpu_custom_call.1} parent=67 // pred_check_branch
          %498 = sbr.rel (%p496) target = $region72
        $region71: #{tpu_custom_call.1} parent=67 // pred_region
          %s499 = sand.u32 %s199, 1
          %s500 = scalar_lea.sflag [#allocation6], %s499
          %s501 = sand.u32 %s199, 1
          %s502 = smul.addr %s501, 8
          %s503 = scalar_lea.vmem [#allocation7], %s502
          %505 = dma.done %s500, 128
        $region72: #{tpu_custom_call.1} parent=67 // pred_fallthru
          _
      $region68: #{tpu_custom_call.1} parent=5 // pred_fallthru
        _
    $region6: #{tpu_custom_call.1} parent=1 // loop_footer
      %s21 = sadd.s32 1, %s17
    $region7: #{tpu_custom_call.1} parent=1 // loop_footer_branch
      %16 = sbr.rel target = $region3
    $region8: #{tpu_custom_call.1} parent=1 // loop_exit
      _
    %506 = vsyncpa [#allocation5], 1
    %s507 = scalar_lea.sflag [#allocation5], 1
    %508 = vsyncpa %s507, 1
    %509 = vsyncpa [#allocation6], 1
    %s510 = scalar_lea.sflag [#allocation6], 1
    %511 = vsyncpa %s510, 1

</llo_original>
